<compile_context>
chip_gen: v6e
topology: v6e:2x2x1
jax: 0.10.0
libtpu: 0.0.40
codegen_flags: <defaults>
</compile_context>

<pallas_src>
import functools

import jax
import jax.numpy as jnp
from jax.experimental import pallas as pl
from jax.experimental.pallas import tpu as pltpu


def _round_up(x, m):
    return (x + m - 1) // m * m


# ---------------------------------------------------------------------------
# Fused kernel: runs ALL T reverse-diffusion steps in one invocation.
#   model:  conv1(3x3, + per-step time bias, SiLU) -> conv2(3x3) -> eps
#   update: x <- (x - beta_t/sqrt(1-ab_t) * eps) / sqrt(alpha_t) + sigma_t * z
#   final:  clip(x, -1, 1)
# Layout: activations are (channels_padded_to_8, pixels) with pixels = N*H*W lane-dense.
# ---------------------------------------------------------------------------
def _ddpm_fused_kernel(coef_ref, isqa_ref,                  # SMEM (T,) per-step scalars
                       x0_ref, w1_ref, w2_ref, b1_ref,      # VMEM resident
                       b2_ref, tapmask_ref, noise_ref,      # VMEM resident
                       o_ref,                               # VMEM output
                       *, W, T):
    # ---- loop-invariant values: loaded / computed exactly once ----
    tapmask = tapmask_ref[...]          # (9, P) f32 in {0,1}: border masks per 3x3 tap
    w1 = w1_ref[...]                    # (C_hid, 9*C_in_pad) bf16, taps flattened into K
    w2 = w2_ref[...]                    # (C_in_pad, 9*C_hid) bf16
    b2 = b2_ref[...]                    # (C_in_pad, 1) f32
    shifts = tuple(dh * W + dw for dh in (-1, 0, 1) for dw in (-1, 0, 1))

    def conv3x3(a, w_flat):
        # 'same' 3x3 conv as ONE MXU matmul: stack the 9 shifted+masked taps along the
        # contraction axis (rows padded to a multiple of 8 -> tile-aligned sublane concat),
        # cast once to bf16 right before the dot, accumulate in f32.
        taps = []
        for k, s in enumerate(shifts):
            t = a if s == 0 else jnp.roll(a, -s, axis=1)
            if s != 0:
                t = t * tapmask[k:k + 1, :]      # zero out-of-image taps (and image seams)
            taps.append(t)
        stacked = jnp.concatenate(taps, axis=0).astype(w_flat.dtype)   # (9*C, P) bf16
        return jnp.dot(w_flat, stacked, preferred_element_type=jnp.float32)

    def step(i, x):                      # loop index i <-> timestep t = T-1-i
        h1 = conv3x3(x, w1) + b1_ref[i]             # + per-step time-embedding channel bias
        h1 = h1 * jax.nn.sigmoid(h1)                # SiLU (f32, EUP)
        eps = conv3x3(h1, w2) + b2                  # predicted noise
        # x_{t-1} = (x_t - beta_t/sqrt(1-ab_t)*eps) / sqrt(alpha_t) + sigma_t * z
        return (x - coef_ref[i] * eps) * isqa_ref[i] + noise_ref[i]

    x_final = jax.lax.fori_loop(0, T, step, x0_ref[...])
    o_ref[...] = jnp.clip(x_final, -1.0, 1.0)


# ---------------------------------------------------------------------------
# Jitted wrapper: boundary relayout, noise/mask precompute, one pallas_call.
# ---------------------------------------------------------------------------
@jax.jit
def _sample(coef_rev, isqa_rev, sigma_rev, w1_flat, w2_flat, b1_table, b2_pad, x_T, key):
    n, c, h, w = x_T.shape
    p = n * h * w
    t_steps = coef_rev.shape[0]
    c_in_pad = w2_flat.shape[0]

    # Boundary relayout only: NCHW -> (channels, pixels) lane-dense; pad channels to 8.
    x2d = x_T.astype(jnp.float32).transpose(1, 0, 2, 3).reshape(c, p)
    x2d = jnp.pad(x2d, ((0, c_in_pad - c), (0, 0)))

    # All per-step Gaussian noise, pre-scaled by sigma_t (0 at t == 0), ordered by loop step
    # (t = T-1 first).  ~16 MiB at the example size -> fully VMEM resident.
    noise = jax.random.normal(key, (t_steps, c_in_pad, p), jnp.float32)
    noise = noise * sigma_rev[:, None, None]

    # Border masks per 3x3 tap (also stop taps leaking across images in the flat layout).
    pix = jnp.arange(p, dtype=jnp.int32)
    col = pix % w
    row = (pix // w) % h
    masks = []
    for dh in (-1, 0, 1):
        for dw in (-1, 0, 1):
            m = jnp.ones((p,), jnp.bool_)
            if dh == -1:
                m = m & (row >= 1)
            elif dh == 1:
                m = m & (row <= h - 2)
            if dw == -1:
                m = m & (col >= 1)
            elif dw == 1:
                m = m & (col <= w - 2)
            masks.append(m)
    tapmask = jnp.stack(masks, axis=0).astype(jnp.float32)            # (9, P)

    kernel = functools.partial(_ddpm_fused_kernel, W=w, T=t_steps)
    vmem = pl.BlockSpec(memory_space=pltpu.MemorySpace.VMEM)
    smem = pl.BlockSpec(memory_space=pltpu.MemorySpace.SMEM)

    out2d = pl.pallas_call(
        kernel,
        out_shape=jax.ShapeDtypeStruct((c_in_pad, p), jnp.float32),
        in_specs=[smem, smem,                       # coef, 1/sqrt(alpha) tables
                  vmem, vmem, vmem, vmem,           # x_T, w1_flat, w2_flat, b1_table
                  vmem, vmem, vmem],                # b2, tap masks, noise
        out_specs=vmem,
        compiler_params=pltpu.CompilerParams(vmem_limit_bytes=48 * 1024 * 1024),
    )(coef_rev, isqa_rev, x2d, w1_flat, w2_flat, b1_table, b2_pad, tapmask, noise)

    return out2d[:c].reshape(c, n, h, w).transpose(1, 0, 2, 3)        # back to NCHW


# ---------------------------------------------------------------------------
# Synthetic noise-prediction model (stand-in for the injected nn.Module `model`):
# two 3x3 convs + sinusoidal time embedding -> channel bias.  Per-tap weights (9, c_out, c_in).
# ---------------------------------------------------------------------------
def init_model_params(key, c_in=4, c_hid=8, t_emb=16):
    k1, k2, k3 = jax.random.split(key, 3)
    return dict(
        w1=jax.random.normal(k1, (9, c_hid, c_in), jnp.float32) * 0.1,
        b1=jnp.zeros((c_hid,), jnp.float32),
        w2=jax.random.normal(k2, (9, c_in, c_hid), jnp.float32) * 0.1,
        b2=jnp.zeros((c_in,), jnp.float32),
        t_freqs=jnp.exp(-jnp.arange(t_emb // 2, dtype=jnp.float32)
                        * (jnp.log(10000.0) / (t_emb // 2))),
        t_w=jax.random.normal(k3, (t_emb, c_hid), jnp.float32) * 0.1,
        t_b=jnp.zeros((c_hid,), jnp.float32),
    )


class DiffusionSamplerPallas:
    """Pallas-TPU port of DiffusionSampler.forward (DDPM ancestral sampling)."""

    def __init__(self, params, time_steps=1000, beta_1=1e-4, beta_T=0.02):
        self.time_steps = time_steps
        c_hid, c_in = params["w1"].shape[1], params["w1"].shape[2]
        c_in_pad = _round_up(c_in, 8)
        c_hid_pad = _round_up(c_hid, 8)

        beta = jnp.linspace(beta_1, beta_T, time_steps, dtype=jnp.float32)
        alpha = 1.0 - beta
        alpha_bar = jnp.cumprod(alpha)
        coef = beta / jnp.sqrt(1.0 - alpha_bar)           # beta_t / sqrt(1 - alpha_bar_t)
        isqa = 1.0 / jnp.sqrt(alpha)                      # 1 / sqrt(alpha_t)
        sigma = jnp.sqrt(beta).at[0].set(0.0)             # z = 0 at t == 0
        # Pre-reversed so loop step i <-> timestep t = T-1-i.
        self.coef_rev = coef[::-1]
        self.isqa_rev = isqa[::-1]
        self.sigma_rev = sigma[::-1]

        # Per-tap weights (9, c_out, c_in) -> channel-padded, tap-flattened (c_out_pad, 9*c_in_pad).
        def flatten_w(wt, cout, cin, cout_pad, cin_pad):
            wp = jnp.zeros((9, cout_pad, cin_pad), jnp.float32).at[:, :cout, :cin].set(wt)
            return wp.transpose(1, 0, 2).reshape(cout_pad, 9 * cin_pad).astype(jnp.bfloat16)

        self.w1_flat = flatten_w(params["w1"], c_hid, c_in, c_hid_pad, c_in_pad)
        self.w2_flat = flatten_w(params["w2"], c_in, c_hid, c_in_pad, c_hid_pad)
        self.b2_pad = jnp.zeros((c_in_pad, 1), jnp.float32).at[:c_in, 0].set(params["b2"])

        # Time conditioning hoisted out of the loop: conv1 bias for every t (reversed, padded).
        t_all = jnp.arange(time_steps, dtype=jnp.float32)
        ang = t_all[:, None] * params["t_freqs"][None, :]
        temb = jnp.concatenate([jnp.sin(ang), jnp.cos(ang)], axis=1)            # (T, t_emb)
        bias1 = params["b1"][None, :] + temb @ params["t_w"] + params["t_b"][None, :]
        bias1_pad = jnp.zeros((time_steps, c_hid_pad), jnp.float32).at[:, :c_hid].set(bias1)
        self.b1_table = bias1_pad[::-1].reshape(time_steps, c_hid_pad, 1)       # (T, c_hid_pad, 1)

    def __call__(self, x_T, key=None):
        if key is None:
            key = jax.random.PRNGKey(1)
        return _sample(self.coef_rev, self.isqa_rev, self.sigma_rev,
                       self.w1_flat, self.w2_flat, self.b1_table, self.b2_pad,
                       x_T, key)


# ---------------------------------------------------------------------------

if __name__ == "__main__":
    root = jax.random.PRNGKey(0)
    k_params, k_x, k_sample = jax.random.split(root, 3)

    params = init_model_params(k_params, c_in=4, c_hid=8, t_emb=16)
    sampler = DiffusionSamplerPallas(params, time_steps=1000, beta_1=1e-4, beta_T=0.02)

    x_T = jax.random.normal(k_x, (2, 4, 16, 16), jnp.float32)   # NCHW, like torch
    x_0 = jax.block_until_ready(sampler(x_T, key=k_sample))

    assert x_0.shape == (2, 4, 16, 16)
    assert bool(jnp.all(jnp.isfinite(x_0)))
    assert bool(jnp.all(x_0 <= 1.0)) and bool(jnp.all(x_0 >= -1.0))
    print("KERNEL_OK")
</pallas_src>

<mosaic_0001>
module attributes {stable_mosaic.version = 11 : i64} {
  func.func @_ddpm_fused_kernel(%arg0: memref<1000xf32, #tpu.memory_space<smem>>, %arg1: memref<1000xf32, #tpu.memory_space<smem>>, %arg2: memref<8x512xf32, #tpu.memory_space<vmem>>, %arg3: memref<8x72xbf16, #tpu.memory_space<vmem>>, %arg4: memref<8x72xbf16, #tpu.memory_space<vmem>>, %arg5: memref<1000x8x1xf32, #tpu.memory_space<vmem>>, %arg6: memref<8x1xf32, #tpu.memory_space<vmem>>, %arg7: memref<9x512xf32, #tpu.memory_space<vmem>>, %arg8: memref<1000x8x512xf32, #tpu.memory_space<vmem>>, %arg9: memref<8x512xf32, #tpu.memory_space<vmem>>) attributes {dimension_semantics = [], scalar_prefetch = 0 : i64, scratch_operands = 0 : i64, tpu.core_type = #tpu.core_type<tc>} {
    %c0 = arith.constant 0 : index
    %c0_0 = arith.constant 0 : index
    %0 = vector.load %arg7[%c0, %c0_0] : memref<9x512xf32, #tpu.memory_space<vmem>>, vector<9x512xf32>
    %c0_1 = arith.constant 0 : index
    %c0_2 = arith.constant 0 : index
    %1 = vector.load %arg3[%c0_1, %c0_2] : memref<8x72xbf16, #tpu.memory_space<vmem>>, vector<8x72xbf16>
    %c0_3 = arith.constant 0 : index
    %c0_4 = arith.constant 0 : index
    %2 = vector.load %arg4[%c0_3, %c0_4] : memref<8x72xbf16, #tpu.memory_space<vmem>>, vector<8x72xbf16>
    %c0_5 = arith.constant 0 : index
    %c0_6 = arith.constant 0 : index
    %3 = vector.load %arg6[%c0_5, %c0_6] : memref<8x1xf32, #tpu.memory_space<vmem>>, vector<8x1xf32>
    %c0_7 = arith.constant 0 : index
    %c0_8 = arith.constant 0 : index
    %4 = vector.load %arg2[%c0_7, %c0_8] : memref<8x512xf32, #tpu.memory_space<vmem>>, vector<8x512xf32>
    %c0_i32 = arith.constant 0 : i32
    %c1000_i32 = arith.constant 1000 : i32
    %5 = arith.addi %c0_i32, %c1000_i32 : i32
    %c1_i32 = arith.constant 1 : i32
    %6 = scf.for %arg10 = %c0_i32 to %5 step %c1_i32 iter_args(%arg11 = %4) -> (vector<8x512xf32>)  : i32 {
      %12 = vector.extract_strided_slice %arg11 {offsets = [0, 495], sizes = [8, 17], strides = [1, 1]} : vector<8x512xf32> to vector<8x17xf32>
      %13 = vector.extract_strided_slice %arg11 {offsets = [0, 0], sizes = [8, 495], strides = [1, 1]} : vector<8x512xf32> to vector<8x495xf32>
      %14 = tpu.concatenate %12, %13 in 1 : vector<8x17xf32>, vector<8x495xf32> -> vector<8x512xf32>
      %15 = vector.extract_strided_slice %0 {offsets = [0, 0], sizes = [1, 512], strides = [1, 1]} : vector<9x512xf32> to vector<1x512xf32>
      %16 = vector.broadcast %15 : vector<1x512xf32> to vector<8x512xf32>
      %17 = arith.mulf %14, %16 : vector<8x512xf32>
      %18 = vector.extract_strided_slice %arg11 {offsets = [0, 496], sizes = [8, 16], strides = [1, 1]} : vector<8x512xf32> to vector<8x16xf32>
      %19 = vector.extract_strided_slice %arg11 {offsets = [0, 0], sizes = [8, 496], strides = [1, 1]} : vector<8x512xf32> to vector<8x496xf32>
      %20 = tpu.concatenate %18, %19 in 1 : vector<8x16xf32>, vector<8x496xf32> -> vector<8x512xf32>
      %21 = vector.extract_strided_slice %0 {offsets = [1, 0], sizes = [1, 512], strides = [1, 1]} : vector<9x512xf32> to vector<1x512xf32>
      %22 = vector.broadcast %21 : vector<1x512xf32> to vector<8x512xf32>
      %23 = arith.mulf %20, %22 : vector<8x512xf32>
      %24 = vector.extract_strided_slice %arg11 {offsets = [0, 497], sizes = [8, 15], strides = [1, 1]} : vector<8x512xf32> to vector<8x15xf32>
      %25 = vector.extract_strided_slice %arg11 {offsets = [0, 0], sizes = [8, 497], strides = [1, 1]} : vector<8x512xf32> to vector<8x497xf32>
      %26 = tpu.concatenate %24, %25 in 1 : vector<8x15xf32>, vector<8x497xf32> -> vector<8x512xf32>
      %27 = vector.extract_strided_slice %0 {offsets = [2, 0], sizes = [1, 512], strides = [1, 1]} : vector<9x512xf32> to vector<1x512xf32>
      %28 = vector.broadcast %27 : vector<1x512xf32> to vector<8x512xf32>
      %29 = arith.mulf %26, %28 : vector<8x512xf32>
      %30 = vector.extract_strided_slice %arg11 {offsets = [0, 511], sizes = [8, 1], strides = [1, 1]} : vector<8x512xf32> to vector<8x1xf32>
      %31 = vector.extract_strided_slice %arg11 {offsets = [0, 0], sizes = [8, 511], strides = [1, 1]} : vector<8x512xf32> to vector<8x511xf32>
      %32 = tpu.concatenate %30, %31 in 1 : vector<8x1xf32>, vector<8x511xf32> -> vector<8x512xf32>
      %33 = vector.extract_strided_slice %0 {offsets = [3, 0], sizes = [1, 512], strides = [1, 1]} : vector<9x512xf32> to vector<1x512xf32>
      %34 = vector.broadcast %33 : vector<1x512xf32> to vector<8x512xf32>
      %35 = arith.mulf %32, %34 : vector<8x512xf32>
      %36 = vector.extract_strided_slice %arg11 {offsets = [0, 1], sizes = [8, 511], strides = [1, 1]} : vector<8x512xf32> to vector<8x511xf32>
      %37 = vector.extract_strided_slice %arg11 {offsets = [0, 0], sizes = [8, 1], strides = [1, 1]} : vector<8x512xf32> to vector<8x1xf32>
      %38 = tpu.concatenate %36, %37 in 1 : vector<8x511xf32>, vector<8x1xf32> -> vector<8x512xf32>
      %39 = vector.extract_strided_slice %0 {offsets = [5, 0], sizes = [1, 512], strides = [1, 1]} : vector<9x512xf32> to vector<1x512xf32>
      %40 = vector.broadcast %39 : vector<1x512xf32> to vector<8x512xf32>
      %41 = arith.mulf %38, %40 : vector<8x512xf32>
      %42 = vector.extract_strided_slice %arg11 {offsets = [0, 15], sizes = [8, 497], strides = [1, 1]} : vector<8x512xf32> to vector<8x497xf32>
      %43 = vector.extract_strided_slice %arg11 {offsets = [0, 0], sizes = [8, 15], strides = [1, 1]} : vector<8x512xf32> to vector<8x15xf32>
      %44 = tpu.concatenate %42, %43 in 1 : vector<8x497xf32>, vector<8x15xf32> -> vector<8x512xf32>
      %45 = vector.extract_strided_slice %0 {offsets = [6, 0], sizes = [1, 512], strides = [1, 1]} : vector<9x512xf32> to vector<1x512xf32>
      %46 = vector.broadcast %45 : vector<1x512xf32> to vector<8x512xf32>
      %47 = arith.mulf %44, %46 : vector<8x512xf32>
      %48 = vector.extract_strided_slice %arg11 {offsets = [0, 16], sizes = [8, 496], strides = [1, 1]} : vector<8x512xf32> to vector<8x496xf32>
      %49 = vector.extract_strided_slice %arg11 {offsets = [0, 0], sizes = [8, 16], strides = [1, 1]} : vector<8x512xf32> to vector<8x16xf32>
      %50 = tpu.concatenate %48, %49 in 1 : vector<8x496xf32>, vector<8x16xf32> -> vector<8x512xf32>
      %51 = vector.extract_strided_slice %0 {offsets = [7, 0], sizes = [1, 512], strides = [1, 1]} : vector<9x512xf32> to vector<1x512xf32>
      %52 = vector.broadcast %51 : vector<1x512xf32> to vector<8x512xf32>
      %53 = arith.mulf %50, %52 : vector<8x512xf32>
      %54 = vector.extract_strided_slice %arg11 {offsets = [0, 17], sizes = [8, 495], strides = [1, 1]} : vector<8x512xf32> to vector<8x495xf32>
      %55 = vector.extract_strided_slice %arg11 {offsets = [0, 0], sizes = [8, 17], strides = [1, 1]} : vector<8x512xf32> to vector<8x17xf32>
      %56 = tpu.concatenate %54, %55 in 1 : vector<8x495xf32>, vector<8x17xf32> -> vector<8x512xf32>
      %57 = vector.extract_strided_slice %0 {offsets = [8, 0], sizes = [1, 512], strides = [1, 1]} : vector<9x512xf32> to vector<1x512xf32>
      %58 = vector.broadcast %57 : vector<1x512xf32> to vector<8x512xf32>
      %59 = arith.mulf %56, %58 : vector<8x512xf32>
      %60 = tpu.concatenate %17, %23, %29, %35, %arg11, %41, %47, %53, %59 in 0 : vector<8x512xf32>, vector<8x512xf32>, vector<8x512xf32>, vector<8x512xf32>, vector<8x512xf32>, vector<8x512xf32>, vector<8x512xf32>, vector<8x512xf32>, vector<8x512xf32> -> vector<72x512xf32>
      %61 = arith.truncf %60 : vector<72x512xf32> to vector<72x512xbf16>
      %cst_13 = arith.constant dense<0.000000e+00> : vector<8x512xf32>
      %62 = tpu.matmul %1, %61, %cst_13 {dimension_numbers = #tpu.dot_dimension_numbers<[1], [0], [0], [1], [0, 0, 1, 1], [], []>} : vector<8x72xbf16>, vector<72x512xbf16>, vector<8x512xf32> -> vector<8x512xf32>
      %63 = arith.index_cast %arg10 : i32 to index
      %c0_14 = arith.constant 0 : index
      %c0_15 = arith.constant 0 : index
      %64 = vector.load %arg5[%63, %c0_14, %c0_15] : memref<1000x8x1xf32, #tpu.memory_space<vmem>>, vector<1x8x1xf32>
      %65 = vector.shape_cast %64 : vector<1x8x1xf32> to vector<8x1xf32>
      %66 = vector.broadcast %65 : vector<8x1xf32> to vector<8x512xf32>
      %67 = arith.addf %62, %66 : vector<8x512xf32>
      %68 = arith.negf %67 : vector<8x512xf32>
      %69 = math.exp %68 : vector<8x512xf32>
      %cst_16 = arith.constant 1.000000e+00 : f32
      %70 = vector.broadcast %cst_16 : f32 to vector<8x512xf32>
      %71 = arith.addf %70, %69 : vector<8x512xf32>
      %72 = arith.divf %70, %71 : vector<8x512xf32>
      %73 = arith.mulf %67, %72 : vector<8x512xf32>
      %74 = vector.extract_strided_slice %73 {offsets = [0, 495], sizes = [8, 17], strides = [1, 1]} : vector<8x512xf32> to vector<8x17xf32>
      %75 = vector.extract_strided_slice %73 {offsets = [0, 0], sizes = [8, 495], strides = [1, 1]} : vector<8x512xf32> to vector<8x495xf32>
      %76 = tpu.concatenate %74, %75 in 1 : vector<8x17xf32>, vector<8x495xf32> -> vector<8x512xf32>
      %77 = vector.extract_strided_slice %0 {offsets = [0, 0], sizes = [1, 512], strides = [1, 1]} : vector<9x512xf32> to vector<1x512xf32>
      %78 = vector.broadcast %77 : vector<1x512xf32> to vector<8x512xf32>
      %79 = arith.mulf %76, %78 : vector<8x512xf32>
      %80 = vector.extract_strided_slice %73 {offsets = [0, 496], sizes = [8, 16], strides = [1, 1]} : vector<8x512xf32> to vector<8x16xf32>
      %81 = vector.extract_strided_slice %73 {offsets = [0, 0], sizes = [8, 496], strides = [1, 1]} : vector<8x512xf32> to vector<8x496xf32>
      %82 = tpu.concatenate %80, %81 in 1 : vector<8x16xf32>, vector<8x496xf32> -> vector<8x512xf32>
      %83 = vector.extract_strided_slice %0 {offsets = [1, 0], sizes = [1, 512], strides = [1, 1]} : vector<9x512xf32> to vector<1x512xf32>
      %84 = vector.broadcast %83 : vector<1x512xf32> to vector<8x512xf32>
      %85 = arith.mulf %82, %84 : vector<8x512xf32>
      %86 = vector.extract_strided_slice %73 {offsets = [0, 497], sizes = [8, 15], strides = [1, 1]} : vector<8x512xf32> to vector<8x15xf32>
      %87 = vector.extract_strided_slice %73 {offsets = [0, 0], sizes = [8, 497], strides = [1, 1]} : vector<8x512xf32> to vector<8x497xf32>
      %88 = tpu.concatenate %86, %87 in 1 : vector<8x15xf32>, vector<8x497xf32> -> vector<8x512xf32>
      %89 = vector.extract_strided_slice %0 {offsets = [2, 0], sizes = [1, 512], strides = [1, 1]} : vector<9x512xf32> to vector<1x512xf32>
      %90 = vector.broadcast %89 : vector<1x512xf32> to vector<8x512xf32>
      %91 = arith.mulf %88, %90 : vector<8x512xf32>
      %92 = vector.extract_strided_slice %73 {offsets = [0, 511], sizes = [8, 1], strides = [1, 1]} : vector<8x512xf32> to vector<8x1xf32>
      %93 = vector.extract_strided_slice %73 {offsets = [0, 0], sizes = [8, 511], strides = [1, 1]} : vector<8x512xf32> to vector<8x511xf32>
      %94 = tpu.concatenate %92, %93 in 1 : vector<8x1xf32>, vector<8x511xf32> -> vector<8x512xf32>
      %95 = vector.extract_strided_slice %0 {offsets = [3, 0], sizes = [1, 512], strides = [1, 1]} : vector<9x512xf32> to vector<1x512xf32>
      %96 = vector.broadcast %95 : vector<1x512xf32> to vector<8x512xf32>
      %97 = arith.mulf %94, %96 : vector<8x512xf32>
      %98 = vector.extract_strided_slice %73 {offsets = [0, 1], sizes = [8, 511], strides = [1, 1]} : vector<8x512xf32> to vector<8x511xf32>
      %99 = vector.extract_strided_slice %73 {offsets = [0, 0], sizes = [8, 1], strides = [1, 1]} : vector<8x512xf32> to vector<8x1xf32>
      %100 = tpu.concatenate %98, %99 in 1 : vector<8x511xf32>, vector<8x1xf32> -> vector<8x512xf32>
      %101 = vector.extract_strided_slice %0 {offsets = [5, 0], sizes = [1, 512], strides = [1, 1]} : vector<9x512xf32> to vector<1x512xf32>
      %102 = vector.broadcast %101 : vector<1x512xf32> to vector<8x512xf32>
      %103 = arith.mulf %100, %102 : vector<8x512xf32>
      %104 = vector.extract_strided_slice %73 {offsets = [0, 15], sizes = [8, 497], strides = [1, 1]} : vector<8x512xf32> to vector<8x497xf32>
      %105 = vector.extract_strided_slice %73 {offsets = [0, 0], sizes = [8, 15], strides = [1, 1]} : vector<8x512xf32> to vector<8x15xf32>
      %106 = tpu.concatenate %104, %105 in 1 : vector<8x497xf32>, vector<8x15xf32> -> vector<8x512xf32>
      %107 = vector.extract_strided_slice %0 {offsets = [6, 0], sizes = [1, 512], strides = [1, 1]} : vector<9x512xf32> to vector<1x512xf32>
      %108 = vector.broadcast %107 : vector<1x512xf32> to vector<8x512xf32>
      %109 = arith.mulf %106, %108 : vector<8x512xf32>
      %110 = vector.extract_strided_slice %73 {offsets = [0, 16], sizes = [8, 496], strides = [1, 1]} : vector<8x512xf32> to vector<8x496xf32>
      %111 = vector.extract_strided_slice %73 {offsets = [0, 0], sizes = [8, 16], strides = [1, 1]} : vector<8x512xf32> to vector<8x16xf32>
      %112 = tpu.concatenate %110, %111 in 1 : vector<8x496xf32>, vector<8x16xf32> -> vector<8x512xf32>
      %113 = vector.extract_strided_slice %0 {offsets = [7, 0], sizes = [1, 512], strides = [1, 1]} : vector<9x512xf32> to vector<1x512xf32>
      %114 = vector.broadcast %113 : vector<1x512xf32> to vector<8x512xf32>
      %115 = arith.mulf %112, %114 : vector<8x512xf32>
      %116 = vector.extract_strided_slice %73 {offsets = [0, 17], sizes = [8, 495], strides = [1, 1]} : vector<8x512xf32> to vector<8x495xf32>
      %117 = vector.extract_strided_slice %73 {offsets = [0, 0], sizes = [8, 17], strides = [1, 1]} : vector<8x512xf32> to vector<8x17xf32>
      %118 = tpu.concatenate %116, %117 in 1 : vector<8x495xf32>, vector<8x17xf32> -> vector<8x512xf32>
      %119 = vector.extract_strided_slice %0 {offsets = [8, 0], sizes = [1, 512], strides = [1, 1]} : vector<9x512xf32> to vector<1x512xf32>
      %120 = vector.broadcast %119 : vector<1x512xf32> to vector<8x512xf32>
      %121 = arith.mulf %118, %120 : vector<8x512xf32>
      %122 = tpu.concatenate %79, %85, %91, %97, %73, %103, %109, %115, %121 in 0 : vector<8x512xf32>, vector<8x512xf32>, vector<8x512xf32>, vector<8x512xf32>, vector<8x512xf32>, vector<8x512xf32>, vector<8x512xf32>, vector<8x512xf32>, vector<8x512xf32> -> vector<72x512xf32>
      %123 = arith.truncf %122 : vector<72x512xf32> to vector<72x512xbf16>
      %cst_17 = arith.constant dense<0.000000e+00> : vector<8x512xf32>
      %124 = tpu.matmul %2, %123, %cst_17 {dimension_numbers = #tpu.dot_dimension_numbers<[1], [0], [0], [1], [0, 0, 1, 1], [], []>} : vector<8x72xbf16>, vector<72x512xbf16>, vector<8x512xf32> -> vector<8x512xf32>
      %125 = vector.broadcast %3 : vector<8x1xf32> to vector<8x512xf32>
      %126 = arith.addf %124, %125 : vector<8x512xf32>
      %127 = arith.index_cast %arg10 : i32 to index
      %128 = memref.load %arg0[%127] : memref<1000xf32, #tpu.memory_space<smem>>
      %129 = vector.broadcast %128 : f32 to vector<8x512xf32>
      %130 = arith.mulf %129, %126 : vector<8x512xf32>
      %131 = arith.subf %arg11, %130 : vector<8x512xf32>
      %132 = arith.index_cast %arg10 : i32 to index
      %133 = memref.load %arg1[%132] : memref<1000xf32, #tpu.memory_space<smem>>
      %134 = vector.broadcast %133 : f32 to vector<8x512xf32>
      %135 = arith.mulf %131, %134 : vector<8x512xf32>
      %136 = arith.index_cast %arg10 : i32 to index
      %c0_18 = arith.constant 0 : index
      %c0_19 = arith.constant 0 : index
      %137 = vector.load %arg8[%136, %c0_18, %c0_19] : memref<1000x8x512xf32, #tpu.memory_space<vmem>>, vector<1x8x512xf32>
      %138 = vector.shape_cast %137 : vector<1x8x512xf32> to vector<8x512xf32>
      %139 = arith.addf %135, %138 : vector<8x512xf32>
      scf.yield %139 : vector<8x512xf32>
    }
    %c1000_i32_9 = arith.constant 1000 : i32
    %cst = arith.constant -1.000000e+00 : f32
    %cst_10 = arith.constant 1.000000e+00 : f32
    %7 = vector.broadcast %cst : f32 to vector<8x512xf32>
    %8 = arith.maximumf %7, %6 : vector<8x512xf32>
    %9 = vector.broadcast %cst_10 : f32 to vector<8x512xf32>
    %10 = arith.minimumf %9, %8 : vector<8x512xf32>
    %c0_11 = arith.constant 0 : index
    %c0_12 = arith.constant 0 : index
    %11 = vector.load %arg9[%c0_11, %c0_12] : memref<8x512xf32, #tpu.memory_space<vmem>>, vector<8x512xf32>
    tpu.vector_store %arg9[%c0_11, %c0_12], %10 {strides = array<i32>} : memref<8x512xf32, #tpu.memory_space<vmem>>, vector<8x512xf32>,
    return
  }
}

</mosaic_0001>

<llo_original>
// kernel: _sample.1
$region0: #{_sample.1}
  #allocation0 [shape = 'u32[]', space=smem, size = 0x4, offset = 0x4, fixed_abs, tag = 'smem constant byte address 0x4 - core index']
  #allocation1 [shape = 'u32[144,128]{1,0:T(1,128)}', space=vmem, size = 0x12000, scoped, tag = 'internal scratch']
  %s0 = inlined_call_operand.vmem [shape: f32[1000], index: 0, kind: input, shape index: {}]
  %s1 = inlined_call_operand.vmem [shape: f32[1000], index: 1, kind: input, shape index: {}]
  %s2 = inlined_call_operand.vmem [shape: f32[8,512], index: 2, kind: input, shape index: {}]
  %s3 = inlined_call_operand.vmem [shape: bf16[8,72], index: 3, kind: input, shape index: {}]
  %s4 = inlined_call_operand.vmem [shape: bf16[8,72], index: 4, kind: input, shape index: {}]
  %s5 = inlined_call_operand.vmem [shape: f32[1000,8,1], index: 5, kind: input, shape index: {}]
  %s6 = inlined_call_operand.vmem [shape: f32[8,1], index: 6, kind: input, shape index: {}]
  %s7 = inlined_call_operand.vmem [shape: f32[9,512], index: 7, kind: input, shape index: {}]
  %s8 = inlined_call_operand.vmem [shape: f32[1000,8,512], index: 8, kind: input, shape index: {}]
  %s9 = inlined_call_operand.vmem [shape: f32[8,512], index: 9, kind: output, shape index: {}]
  %s10 = sld [smem:[#allocation0]]
  $region61: #{_sample.1} parent=0
    _
  %s12 = ssub.s32 1, %s10
  %s13 = scalar_select 0, %s12, %s10
  $region1: #{_sample.1} parent=0
    #allocation2 [shape = 'u8[4096]{0}', space=smem, size = 0x1000, scoped, tag = 'input window, operand 0, single buffered']
    #allocation3 [shape = 's32[1]{0}', space=sflag, size = 0x4, scoped, tag = 'scoped memory for _sample.1']
    #allocation4 [shape = 'u8[4096]{0}', space=smem, size = 0x1000, scoped, tag = 'input window, operand 1, single buffered']
    #allocation5 [shape = 's32[1]{0}', space=sflag, size = 0x4, scoped, tag = 'scoped memory for _sample.1']
    %14 = vsyncpa [#allocation3], 0
    %15 = vsyncpa [#allocation5], 0
    // Predicated region
    $region2: #{_sample.1} parent=1 // pred_check
      _
    $region3: #{_sample.1} parent=1 // pred_check_branch
      %17 = sbr.rel (0) target = $region5
    $region4: #{_sample.1} parent=1 // pred_region
      %s19 = ssub.s32 128, 128
      %20 = vsyncadd [#allocation3], %s19
      %s22 = sshll.u32 %s0, 4
      %s23 = int_to_ptr.vmem [resolvable:$true] %s22
      %25 = dma.vmem_to_smem %s23, 128, [#allocation2], [#allocation3]
    $region5: #{_sample.1} parent=1 // pred_fallthru
      _
    // Predicated region
    $region6: #{_sample.1} parent=1 // pred_check
      _
    $region7: #{_sample.1} parent=1 // pred_check_branch
      %27 = sbr.rel (0) target = $region9
    $region8: #{_sample.1} parent=1 // pred_region
      %s29 = ssub.s32 128, 128
      %30 = vsyncadd [#allocation5], %s29
      %s32 = sshll.u32 %s1, 4
      %s33 = int_to_ptr.vmem [resolvable:$true] %s32
      %35 = dma.vmem_to_smem %s33, 128, [#allocation4], [#allocation5]
    $region9: #{_sample.1} parent=1 // pred_fallthru
      _
    // Predicated region
    $region10: #{_sample.1} parent=1 // pred_check
      _
    $region11: #{_sample.1} parent=1 // pred_check_branch
      %37 = sbr.rel (0) target = $region13
    $region12: #{_sample.1} parent=1 // pred_region
      _
    $region13: #{_sample.1} parent=1 // pred_fallthru
      _
    // Predicated region
    $region14: #{_sample.1} parent=1 // pred_check
      _
    $region15: #{_sample.1} parent=1 // pred_check_branch
      %39 = sbr.rel (0) target = $region17
    $region16: #{_sample.1} parent=1 // pred_region
      _
    $region17: #{_sample.1} parent=1 // pred_fallthru
      _
    // Predicated region
    $region18: #{_sample.1} parent=1 // pred_check
      _
    $region19: #{_sample.1} parent=1 // pred_check_branch
      %41 = sbr.rel (0) target = $region21
    $region20: #{_sample.1} parent=1 // pred_region
      _
    $region21: #{_sample.1} parent=1 // pred_fallthru
      _
    // Predicated region
    $region22: #{_sample.1} parent=1 // pred_check
      _
    $region23: #{_sample.1} parent=1 // pred_check_branch
      %43 = sbr.rel (0) target = $region25
    $region24: #{_sample.1} parent=1 // pred_region
      _
    $region25: #{_sample.1} parent=1 // pred_fallthru
      _
    // Predicated region
    $region26: #{_sample.1} parent=1 // pred_check
      _
    $region27: #{_sample.1} parent=1 // pred_check_branch
      %45 = sbr.rel (0) target = $region29
    $region28: #{_sample.1} parent=1 // pred_region
      _
    $region29: #{_sample.1} parent=1 // pred_fallthru
      _
    // Predicated region
    $region30: #{_sample.1} parent=1 // pred_check
      _
    $region31: #{_sample.1} parent=1 // pred_check_branch
      %47 = sbr.rel (0) target = $region33
    $region32: #{_sample.1} parent=1 // pred_region
      _
    $region33: #{_sample.1} parent=1 // pred_fallthru
      _
    // Predicated region
    $region34: #{_sample.1} parent=1 // pred_check
      _
    $region35: #{_sample.1} parent=1 // pred_check_branch
      %49 = sbr.rel (0) target = $region37
    $region36: #{_sample.1} parent=1 // pred_region
      _
    $region37: #{_sample.1} parent=1 // pred_fallthru
      _
    // Predicated region
    $region38: #{_sample.1} parent=1 // pred_check
      _
    $region39: #{_sample.1} parent=1 // pred_check_branch
      %51 = sbr.rel (0) target = $region41
    $region40: #{_sample.1} parent=1 // pred_region
      %52 = dma.done [#allocation3], 128
    $region41: #{_sample.1} parent=1 // pred_fallthru
      _
    // Predicated region
    $region42: #{_sample.1} parent=1 // pred_check
      _
    $region43: #{_sample.1} parent=1 // pred_check_branch
      %54 = sbr.rel (0) target = $region45
    $region44: #{_sample.1} parent=1 // pred_region
      %55 = dma.done [#allocation5], 128
    $region45: #{_sample.1} parent=1 // pred_fallthru
      _
    %56 = sfence
    %v58 = vld [vmem:[%s7] sm:$0xff]
    %v59 = vld [vmem:[%s7 + $0x8] sm:$0xff]
    %v60 = vld [vmem:[%s7 + $0x10] sm:$0xff]
    %v61 = vld [vmem:[%s7 + $0x18] sm:$0xff]
    %v62 = vld [vmem:[%s7 + $0x20] sm:$0x1]
    %v63 = vld [vmem:[%s7 + $0x28] sm:$0x1]
    %v64 = vld [vmem:[%s7 + $0x30] sm:$0x1]
    %v65 = vld [vmem:[%s7 + $0x38] sm:$0x1]
    %v66 = vld [vmem:[%s3] sm:$0xf]
    %v67 = vld [vmem:[%s4] sm:$0xf]
    %v68 = vld [vmem:[%s6] sm:$0xff]
    %v69 = vld [vmem:[%s2] sm:$0xff]
    %v70 = vld [vmem:[%s2 + $0x8] sm:$0xff]
    %v71 = vld [vmem:[%s2 + $0x10] sm:$0xff]
    %v72 = vld [vmem:[%s2 + $0x18] sm:$0xff]
    loop: start=0, step=1, limit=1000
    $region46: #{_sample.1} parent=1 // loop_pre_header
      _
    $region47: #{_sample.1} parent=1 // loop_header
      %s74 = sphi 0, %s78
      %p75 = scmp.ge.s32.totalorder %s74, 1000
      %v79 = vphi %v69, %v863
      %v80 = vphi %v70, %v864
      %v81 = vphi %v71, %v865
      %v82 = vphi %v72, %v866
    $region48: #{_sample.1} parent=1 // loop_header_branch
      %77 = sbr.rel (%p75) target = $region52
    $region49: #{_sample.1} parent=1 // loop_body
      %84 = vrot.lane.b32.xlu0 %v82, 17
      %v85 = vpop.permute.xlu0 %84
      %90 = vrot.lane.b32.xlu0 %v79, 17
      %v91 = vpop.permute.xlu0 %90
      %92 = vrot.lane.b32.xlu0 %v80, 17
      %v93 = vpop.permute.xlu0 %92
      %94 = vrot.lane.b32.xlu0 %v81, 17
      %v95 = vpop.permute.xlu0 %94
      %vm96 = vcmask 138240
      %v97 = vsel %vm96, %v91, %v93
      %v98 = vsel %vm96, %v93, %v95
      %v99 = vsel %vm96, %v95, %v85
      %v104 = vsel %vm96, %v85, %v91
      %v105 = vlaneseq
      %v106 = vshrl.u32 %v105, 7
      %v107 = vsub.s32 0, %v106
      %v108 = vrot.slane %v58, %v107
      %v109 = vlaneseq
      %v110 = vshrl.u32 %v109, 7
      %v111 = vsub.s32 0, %v110
      %v112 = vrot.slane %v59, %v111
      %v113 = vlaneseq
      %v114 = vshrl.u32 %v113, 7
      %v115 = vsub.s32 0, %v114
      %v116 = vrot.slane %v60, %v115
      %v117 = vlaneseq
      %v118 = vshrl.u32 %v117, 7
      %v119 = vsub.s32 0, %v118
      %v120 = vrot.slane %v61, %v119
      %v121 = vmul.f32 %v104, %v108
      %v122 = vmul.f32 %v97, %v112
      %v123 = vmul.f32 %v98, %v116
      %v124 = vmul.f32 %v99, %v120
      %125 = vrot.lane.b32.xlu0 %v82, 16
      %v126 = vpop.permute.xlu0 %125
      %128 = vrot.lane.b32.xlu0 %v79, 16
      %v129 = vpop.permute.xlu0 %128
      %130 = vrot.lane.b32.xlu0 %v80, 16
      %v131 = vpop.permute.xlu0 %130
      %132 = vrot.lane.b32.xlu0 %v81, 16
      %v133 = vpop.permute.xlu0 %132
      %vm134 = vcmask 130048
      %v135 = vsel %vm134, %v129, %v131
      %v136 = vsel %vm134, %v131, %v133
      %v137 = vsel %vm134, %v133, %v126
      %v142 = vsel %vm134, %v126, %v129
      %v143 = vlaneseq
      %v144 = vshrl.u32 %v143, 7
      %v145 = vsub.s32 1, %v144
      %v146 = vrot.slane %v58, %v145
      %v147 = vlaneseq
      %v148 = vshrl.u32 %v147, 7
      %v149 = vsub.s32 1, %v148
      %v150 = vrot.slane %v59, %v149
      %v151 = vlaneseq
      %v152 = vshrl.u32 %v151, 7
      %v153 = vsub.s32 1, %v152
      %v154 = vrot.slane %v60, %v153
      %v155 = vlaneseq
      %v156 = vshrl.u32 %v155, 7
      %v157 = vsub.s32 1, %v156
      %v158 = vrot.slane %v61, %v157
      %v159 = vmul.f32 %v142, %v146
      %v160 = vmul.f32 %v135, %v150
      %v161 = vmul.f32 %v136, %v154
      %v162 = vmul.f32 %v137, %v158
      %163 = vrot.lane.b32.xlu0 %v82, 15
      %v164 = vpop.permute.xlu0 %163
      %166 = vrot.lane.b32.xlu0 %v79, 15
      %v167 = vpop.permute.xlu0 %166
      %168 = vrot.lane.b32.xlu0 %v80, 15
      %v169 = vpop.permute.xlu0 %168
      %170 = vrot.lane.b32.xlu0 %v81, 15
      %v171 = vpop.permute.xlu0 %170
      %vm172 = vcmask 121856
      %v173 = vsel %vm172, %v167, %v169
      %v174 = vsel %vm172, %v169, %v171
      %v175 = vsel %vm172, %v171, %v164
      %v180 = vsel %vm172, %v164, %v167
      %v181 = vlaneseq
      %v182 = vshrl.u32 %v181, 7
      %v183 = vsub.s32 2, %v182
      %v184 = vrot.slane %v58, %v183
      %v185 = vlaneseq
      %v186 = vshrl.u32 %v185, 7
      %v187 = vsub.s32 2, %v186
      %v188 = vrot.slane %v59, %v187
      %v189 = vlaneseq
      %v190 = vshrl.u32 %v189, 7
      %v191 = vsub.s32 2, %v190
      %v192 = vrot.slane %v60, %v191
      %v193 = vlaneseq
      %v194 = vshrl.u32 %v193, 7
      %v195 = vsub.s32 2, %v194
      %v196 = vrot.slane %v61, %v195
      %v197 = vmul.f32 %v180, %v184
      %v198 = vmul.f32 %v173, %v188
      %v199 = vmul.f32 %v174, %v192
      %v200 = vmul.f32 %v175, %v196
      %201 = vrot.lane.b32.xlu0 %v82, 1
      %v202 = vpop.permute.xlu0 %201
      %204 = vrot.lane.b32.xlu0 %v79, 1
      %v205 = vpop.permute.xlu0 %204
      %206 = vrot.lane.b32.xlu0 %v80, 1
      %v207 = vpop.permute.xlu0 %206
      %208 = vrot.lane.b32.xlu0 %v81, 1
      %v209 = vpop.permute.xlu0 %208
      %vm210 = vcmask 7168
      %v211 = vsel %vm210, %v205, %v207
      %v212 = vsel %vm210, %v207, %v209
      %v213 = vsel %vm210, %v209, %v202
      %v218 = vsel %vm210, %v202, %v205
      %v219 = vlaneseq
      %v220 = vshrl.u32 %v219, 7
      %v221 = vsub.s32 3, %v220
      %v222 = vrot.slane %v58, %v221
      %v223 = vlaneseq
      %v224 = vshrl.u32 %v223, 7
      %v225 = vsub.s32 3, %v224
      %v226 = vrot.slane %v59, %v225
      %v227 = vlaneseq
      %v228 = vshrl.u32 %v227, 7
      %v229 = vsub.s32 3, %v228
      %v230 = vrot.slane %v60, %v229
      %v231 = vlaneseq
      %v232 = vshrl.u32 %v231, 7
      %v233 = vsub.s32 3, %v232
      %v234 = vrot.slane %v61, %v233
      %v235 = vmul.f32 %v218, %v222
      %v236 = vmul.f32 %v211, %v226
      %v237 = vmul.f32 %v212, %v230
      %v238 = vmul.f32 %v213, %v234
      %239 = vrot.lane.b32.xlu0 %v79, 127
      %v240 = vpop.permute.xlu0 %239
      %241 = vrot.lane.b32.xlu0 %v80, 127
      %v242 = vpop.permute.xlu0 %241
      %243 = vrot.lane.b32.xlu0 %v81, 127
      %v244 = vpop.permute.xlu0 %243
      %245 = vrot.lane.b32.xlu0 %v82, 127
      %v246 = vpop.permute.xlu0 %245
      %vm247 = vcmask 1039360
      %v248 = vsel %vm247, %v240, %v242
      %v249 = vsel %vm247, %v242, %v244
      %v250 = vsel %vm247, %v244, %v246
      %v256 = vsel %vm247, %v246, %v240
      %v257 = vlaneseq
      %v258 = vshrl.u32 %v257, 7
      %v259 = vsub.s32 5, %v258
      %v260 = vrot.slane %v58, %v259
      %v261 = vlaneseq
      %v262 = vshrl.u32 %v261, 7
      %v263 = vsub.s32 5, %v262
      %v264 = vrot.slane %v59, %v263
      %v265 = vlaneseq
      %v266 = vshrl.u32 %v265, 7
      %v267 = vsub.s32 5, %v266
      %v268 = vrot.slane %v60, %v267
      %v269 = vlaneseq
      %v270 = vshrl.u32 %v269, 7
      %v271 = vsub.s32 5, %v270
      %v272 = vrot.slane %v61, %v271
      %v273 = vmul.f32 %v248, %v260
      %v274 = vmul.f32 %v249, %v264
      %v275 = vmul.f32 %v250, %v268
      %v276 = vmul.f32 %v256, %v272
      %277 = vrot.lane.b32.xlu0 %v79, 113
      %v278 = vpop.permute.xlu0 %277
      %279 = vrot.lane.b32.xlu0 %v80, 113
      %v280 = vpop.permute.xlu0 %279
      %281 = vrot.lane.b32.xlu0 %v81, 113
      %v282 = vpop.permute.xlu0 %281
      %283 = vrot.lane.b32.xlu0 %v82, 113
      %v284 = vpop.permute.xlu0 %283
      %vm285 = vcmask 924672
      %v286 = vsel %vm285, %v278, %v280
      %v287 = vsel %vm285, %v280, %v282
      %v288 = vsel %vm285, %v282, %v284
      %v294 = vsel %vm285, %v284, %v278
      %v295 = vlaneseq
      %v296 = vshrl.u32 %v295, 7
      %v297 = vsub.s32 6, %v296
      %v298 = vrot.slane %v58, %v297
      %v299 = vlaneseq
      %v300 = vshrl.u32 %v299, 7
      %v301 = vsub.s32 6, %v300
      %v302 = vrot.slane %v59, %v301
      %v303 = vlaneseq
      %v304 = vshrl.u32 %v303, 7
      %v305 = vsub.s32 6, %v304
      %v306 = vrot.slane %v60, %v305
      %v307 = vlaneseq
      %v308 = vshrl.u32 %v307, 7
      %v309 = vsub.s32 6, %v308
      %v310 = vrot.slane %v61, %v309
      %v311 = vmul.f32 %v286, %v298
      %v312 = vmul.f32 %v287, %v302
      %v313 = vmul.f32 %v288, %v306
      %v314 = vmul.f32 %v294, %v310
      %315 = vrot.lane.b32.xlu0 %v79, 112
      %v316 = vpop.permute.xlu0 %315
      %317 = vrot.lane.b32.xlu0 %v80, 112
      %v318 = vpop.permute.xlu0 %317
      %319 = vrot.lane.b32.xlu0 %v81, 112
      %v320 = vpop.permute.xlu0 %319
      %321 = vrot.lane.b32.xlu0 %v82, 112
      %v322 = vpop.permute.xlu0 %321
      %vm323 = vcmask 916480
      %v324 = vsel %vm323, %v316, %v318
      %v325 = vsel %vm323, %v318, %v320
      %v326 = vsel %vm323, %v320, %v322
      %v332 = vsel %vm323, %v322, %v316
      %v333 = vlaneseq
      %v334 = vshrl.u32 %v333, 7
      %v335 = vsub.s32 7, %v334
      %v336 = vrot.slane %v58, %v335
      %v337 = vlaneseq
      %v338 = vshrl.u32 %v337, 7
      %v339 = vsub.s32 7, %v338
      %v340 = vrot.slane %v59, %v339
      %v341 = vlaneseq
      %v342 = vshrl.u32 %v341, 7
      %v343 = vsub.s32 7, %v342
      %v344 = vrot.slane %v60, %v343
      %v345 = vlaneseq
      %v346 = vshrl.u32 %v345, 7
      %v347 = vsub.s32 7, %v346
      %v348 = vrot.slane %v61, %v347
      %v349 = vmul.f32 %v324, %v336
      %v350 = vmul.f32 %v325, %v340
      %v351 = vmul.f32 %v326, %v344
      %v352 = vmul.f32 %v332, %v348
      %353 = vrot.lane.b32.xlu0 %v79, 111
      %v354 = vpop.permute.xlu0 %353
      %355 = vrot.lane.b32.xlu0 %v80, 111
      %v356 = vpop.permute.xlu0 %355
      %357 = vrot.lane.b32.xlu0 %v81, 111
      %v358 = vpop.permute.xlu0 %357
      %359 = vrot.lane.b32.xlu0 %v82, 111
      %v360 = vpop.permute.xlu0 %359
      %vm361 = vcmask 908288
      %v362 = vsel %vm361, %v354, %v356
      %v363 = vsel %vm361, %v356, %v358
      %v364 = vsel %vm361, %v358, %v360
      %v370 = vsel %vm361, %v360, %v354
      %v371 = vlaneseq
      %v372 = vshrl.u32 %v371, 7
      %v373 = vsub.s32 0, %v372
      %v374 = vrot.slane %v62, %v373
      %v375 = vlaneseq
      %v376 = vshrl.u32 %v375, 7
      %v377 = vsub.s32 0, %v376
      %v378 = vrot.slane %v63, %v377
      %v379 = vlaneseq
      %v380 = vshrl.u32 %v379, 7
      %v381 = vsub.s32 0, %v380
      %v382 = vrot.slane %v64, %v381
      %v383 = vlaneseq
      %v384 = vshrl.u32 %v383, 7
      %v385 = vsub.s32 0, %v384
      %v386 = vrot.slane %v65, %v385
      %v387 = vmul.f32 %v362, %v374
      %v388 = vmul.f32 %v363, %v378
      %v389 = vmul.f32 %v364, %v382
      %v390 = vmul.f32 %v370, %v386
      %v391 = vpack.c.bf16 %v159, %v121
      %v392 = vpack.c.bf16 %v160, %v122
      %v393 = vpack.c.bf16 %v161, %v123
      %v394 = vpack.c.bf16 %v162, %v124
      %v395 = vpack.c.bf16 %v235, %v197
      %v396 = vpack.c.bf16 %v236, %v198
      %v397 = vpack.c.bf16 %v237, %v199
      %v398 = vpack.c.bf16 %v238, %v200
      %v399 = vpack.c.bf16 %v273, %v79
      %v400 = vpack.c.bf16 %v274, %v80
      %v401 = vpack.c.bf16 %v275, %v81
      %v402 = vpack.c.bf16 %v276, %v82
      %v403 = vpack.c.bf16 %v349, %v311
      %v404 = vpack.c.bf16 %v350, %v312
      %v405 = vpack.c.bf16 %v351, %v313
      %v406 = vpack.c.bf16 %v352, %v314
      %v407 = vpack.c.bf16 %v387, %v387
      %v408 = vpack.c.bf16 %v388, %v388
      %v409 = vpack.c.bf16 %v389, %v389
      %v410 = vpack.c.bf16 %v390, %v390
      %s411 = smul.u32 %s74, 8
      %s412 = scalar_lea.vmem %s5, %s411
      %v413 = vld [vmem:[%s412] sm:$0xff]
      %415 = vset.pattern.permute.xlu0 0
      %416 = vperm.xlu0 %415, %v413
      %v417 = vpop.permute.xlu0 %416
      %vm419 = vcmask 588800
      %v421 = vsel %vm419, %v66, 0
      %vm423 = vcmask 1043456
      %v425 = vsel %vm423, %v407, 0
      %v428 = vsel %vm423, %v408, 0
      %v431 = vsel %vm423, %v409, 0
      %v434 = vsel %vm423, %v410, 0
      %436 = vmatprep.subr.bf16.mxu0 0
      %437 = vmatpush1.bf16.msra.mxu0 0
      %438 = vmatprep.subr.bf16.mxu0 0
      %439 = vmatpush1.bf16.msra.mxu0 0
      %440 = vmatprep.subr.bf16.mxu0 0
      %441 = vmatpush1.bf16.msra.mxu0 0
      %442 = vmatprep.subr.bf16.mxu0 %v428
      %443 = vmatpush1.bf16.msra.mxu0 %v425
      %444 = vmatprep.subr.bf16.mxu0 %v404
      %445 = vmatpush1.bf16.msra.mxu0 %v403
      %446 = vmatprep.subr.bf16.mxu0 %v400
      %447 = vmatpush1.bf16.msra.mxu0 %v399
      %448 = vmatprep.subr.bf16.mxu0 %v396
      %449 = vmatpush1.bf16.msra.mxu0 %v395
      %450 = vmatprep.subr.bf16.mxu0 %v392
      %451 = vmatpush1.bf16.msra.mxu0 %v391
      %452 = vmatprep.subr.bf16.mxu0 0
      %453 = vmatpush2.bf16.msra.mxu0 0
      %454 = vmatprep.subr.bf16.mxu0 0
      %455 = vmatpush2.bf16.msra.mxu0 0
      %456 = vmatprep.subr.bf16.mxu0 0
      %457 = vmatpush2.bf16.msra.mxu0 0
      %458 = vmatprep.subr.bf16.mxu0 0
      %459 = vmatpush2.bf16.msra.mxu0 0
      %460 = vmatprep.subr.bf16.mxu0 0
      %461 = vmatpush2.bf16.msra.mxu0 0
      %462 = vmatprep.subr.bf16.mxu0 0
      %463 = vmatpush2.bf16.msra.mxu0 0
      %464 = vmatprep.subr.bf16.mxu0 0
      %465 = vmatpush2.bf16.msra.mxu0 0
      %466 = vmatprep.subr.bf16.mxu0 0
      %467 = vmatpush2.bf16.msra.mxu0 0
      %468 = vmatprep.mubr.bf16.mxu0 0
      %469 = vmatmul.mubr.bf16.gmra.mxu0 %v421
      %v470 = vpop.f32.mrf.mxu0
      %v471 = vadd.f32 %v417, %v470
      %v472 = vpop.f32.mrf.mxu0
      %v473 = vadd.f32 %v417, %v472
      %v474 = vpop.f32.mrf.mxu0
      %v475 = vpop.f32.mrf.mxu0
      %476 = vdwg.mxu0
      %477 = vmatprep.subr.bf16.mxu0 0
      %478 = vmatpush1.bf16.msra.mxu0 0
      %479 = vmatprep.subr.bf16.mxu0 0
      %480 = vmatpush1.bf16.msra.mxu0 0
      %481 = vmatprep.subr.bf16.mxu0 0
      %482 = vmatpush1.bf16.msra.mxu0 0
      %483 = vmatprep.subr.bf16.mxu0 %v434
      %484 = vmatpush1.bf16.msra.mxu0 %v431
      %485 = vmatprep.subr.bf16.mxu0 %v406
      %486 = vmatpush1.bf16.msra.mxu0 %v405
      %487 = vmatprep.subr.bf16.mxu0 %v402
      %488 = vmatpush1.bf16.msra.mxu0 %v401
      %489 = vmatprep.subr.bf16.mxu0 %v398
      %490 = vmatpush1.bf16.msra.mxu0 %v397
      %491 = vmatprep.subr.bf16.mxu0 %v394
      %492 = vmatpush1.bf16.msra.mxu0 %v393
      %493 = vmatprep.subr.bf16.mxu0 0
      %494 = vmatpush2.bf16.msra.mxu0 0
      %495 = vmatprep.subr.bf16.mxu0 0
      %496 = vmatpush2.bf16.msra.mxu0 0
      %497 = vmatprep.subr.bf16.mxu0 0
      %498 = vmatpush2.bf16.msra.mxu0 0
      %499 = vmatprep.subr.bf16.mxu0 0
      %500 = vmatpush2.bf16.msra.mxu0 0
      %501 = vmatprep.subr.bf16.mxu0 0
      %502 = vmatpush2.bf16.msra.mxu0 0
      %503 = vmatprep.subr.bf16.mxu0 0
      %504 = vmatpush2.bf16.msra.mxu0 0
      %505 = vmatprep.subr.bf16.mxu0 0
      %506 = vmatpush2.bf16.msra.mxu0 0
      %507 = vmatprep.subr.bf16.mxu0 0
      %508 = vmatpush2.bf16.msra.mxu0 0
      %509 = vmatprep.mubr.bf16.mxu0 0
      %510 = vmatmul.mubr.bf16.gmra.mxu0 %v421
      %v511 = vpop.f32.mrf.mxu0
      %v512 = vadd.f32 %v417, %v511
      %v513 = vpop.f32.mrf.mxu0
      %v514 = vadd.f32 %v417, %v513
      %v515 = vpop.f32.mrf.mxu0
      %v516 = vpop.f32.mrf.mxu0
      %517 = vdwg.mxu0
      %v518 = vxor.u32 %v471, 2147483648
      %v519 = vxor.u32 %v473, 2147483648
      %v520 = vxor.u32 %v512, 2147483648
      %v521 = vxor.u32 %v514, 2147483648
      %v522 = vmul.f32 %v518, 1.442695
      %v523 = vpow.pop %v522
      %v524 = vmul.f32 %v519, 1.442695
      %v525 = vpow.pop %v524
      %v526 = vmul.f32 %v520, 1.442695
      %v527 = vpow.pop %v526
      %v528 = vmul.f32 %v521, 1.442695
      %v529 = vpow.pop %v528
      %v530 = vadd.f32 %v523, 1.0
      %v531 = vadd.f32 %v525, 1.0
      %v532 = vadd.f32 %v527, 1.0
      %v533 = vadd.f32 %v529, 1.0
      %v534 = vrcp.pop %v530
      %v535 = vmul.f32 1.0, %v534
      %v536 = vrcp.pop %v531
      %v537 = vmul.f32 1.0, %v536
      %v538 = vrcp.pop %v532
      %v539 = vmul.f32 1.0, %v538
      %v540 = vrcp.pop %v533
      %v541 = vmul.f32 1.0, %v540
      %v542 = vmul.f32 %v471, %v535
      %v543 = vmul.f32 %v473, %v537
      %v544 = vmul.f32 %v512, %v539
      %v545 = vmul.f32 %v514, %v541
      %547 = vrot.lane.b32.xlu0 %v545, 17
      %v548 = vpop.permute.xlu0 %547
      %553 = vrot.lane.b32.xlu0 %v542, 17
      %v554 = vpop.permute.xlu0 %553
      %555 = vrot.lane.b32.xlu0 %v543, 17
      %v556 = vpop.permute.xlu0 %555
      %557 = vrot.lane.b32.xlu0 %v544, 17
      %v558 = vpop.permute.xlu0 %557
      %v559 = vsel %vm96, %v554, %v556
      %v560 = vsel %vm96, %v556, %v558
      %v561 = vsel %vm96, %v558, %v548
      %v566 = vsel %vm96, %v548, %v554
      %v567 = vmul.f32 %v566, %v108
      %v568 = vmul.f32 %v559, %v112
      %v569 = vmul.f32 %v560, %v116
      %v570 = vmul.f32 %v561, %v120
      %571 = vrot.lane.b32.xlu0 %v545, 16
      %v572 = vpop.permute.xlu0 %571
      %574 = vrot.lane.b32.xlu0 %v542, 16
      %v575 = vpop.permute.xlu0 %574
      %576 = vrot.lane.b32.xlu0 %v543, 16
      %v577 = vpop.permute.xlu0 %576
      %578 = vrot.lane.b32.xlu0 %v544, 16
      %v579 = vpop.permute.xlu0 %578
      %v580 = vsel %vm134, %v575, %v577
      %v581 = vsel %vm134, %v577, %v579
      %v582 = vsel %vm134, %v579, %v572
      %v587 = vsel %vm134, %v572, %v575
      %v588 = vmul.f32 %v587, %v146
      %v589 = vmul.f32 %v580, %v150
      %v590 = vmul.f32 %v581, %v154
      %v591 = vmul.f32 %v582, %v158
      %592 = vrot.lane.b32.xlu0 %v545, 15
      %v593 = vpop.permute.xlu0 %592
      %595 = vrot.lane.b32.xlu0 %v542, 15
      %v596 = vpop.permute.xlu0 %595
      %597 = vrot.lane.b32.xlu0 %v543, 15
      %v598 = vpop.permute.xlu0 %597
      %599 = vrot.lane.b32.xlu0 %v544, 15
      %v600 = vpop.permute.xlu0 %599
      %v601 = vsel %vm172, %v596, %v598
      %v602 = vsel %vm172, %v598, %v600
      %v603 = vsel %vm172, %v600, %v593
      %v608 = vsel %vm172, %v593, %v596
      %v609 = vmul.f32 %v608, %v184
      %v610 = vmul.f32 %v601, %v188
      %v611 = vmul.f32 %v602, %v192
      %v612 = vmul.f32 %v603, %v196
      %613 = vrot.lane.b32.xlu0 %v545, 1
      %v614 = vpop.permute.xlu0 %613
      %616 = vrot.lane.b32.xlu0 %v542, 1
      %v617 = vpop.permute.xlu0 %616
      %618 = vrot.lane.b32.xlu0 %v543, 1
      %v619 = vpop.permute.xlu0 %618
      %620 = vrot.lane.b32.xlu0 %v544, 1
      %v621 = vpop.permute.xlu0 %620
      %v622 = vsel %vm210, %v617, %v619
      %v623 = vsel %vm210, %v619, %v621
      %v624 = vsel %vm210, %v621, %v614
      %v629 = vsel %vm210, %v614, %v617
      %v630 = vmul.f32 %v629, %v222
      %v631 = vmul.f32 %v622, %v226
      %v632 = vmul.f32 %v623, %v230
      %v633 = vmul.f32 %v624, %v234
      %634 = vrot.lane.b32.xlu0 %v542, 127
      %v635 = vpop.permute.xlu0 %634
      %636 = vrot.lane.b32.xlu0 %v543, 127
      %v637 = vpop.permute.xlu0 %636
      %638 = vrot.lane.b32.xlu0 %v544, 127
      %v639 = vpop.permute.xlu0 %638
      %640 = vrot.lane.b32.xlu0 %v545, 127
      %v641 = vpop.permute.xlu0 %640
      %v642 = vsel %vm247, %v635, %v637
      %v643 = vsel %vm247, %v637, %v639
      %v644 = vsel %vm247, %v639, %v641
      %v650 = vsel %vm247, %v641, %v635
      %v651 = vmul.f32 %v642, %v260
      %v652 = vmul.f32 %v643, %v264
      %v653 = vmul.f32 %v644, %v268
      %v654 = vmul.f32 %v650, %v272
      %655 = vrot.lane.b32.xlu0 %v542, 113
      %v656 = vpop.permute.xlu0 %655
      %657 = vrot.lane.b32.xlu0 %v543, 113
      %v658 = vpop.permute.xlu0 %657
      %659 = vrot.lane.b32.xlu0 %v544, 113
      %v660 = vpop.permute.xlu0 %659
      %661 = vrot.lane.b32.xlu0 %v545, 113
      %v662 = vpop.permute.xlu0 %661
      %v663 = vsel %vm285, %v656, %v658
      %v664 = vsel %vm285, %v658, %v660
      %v665 = vsel %vm285, %v660, %v662
      %v671 = vsel %vm285, %v662, %v656
      %v672 = vmul.f32 %v663, %v298
      %v673 = vmul.f32 %v664, %v302
      %v674 = vmul.f32 %v665, %v306
      %v675 = vmul.f32 %v671, %v310
      %676 = vrot.lane.b32.xlu0 %v542, 112
      %v677 = vpop.permute.xlu0 %676
      %678 = vrot.lane.b32.xlu0 %v543, 112
      %v679 = vpop.permute.xlu0 %678
      %680 = vrot.lane.b32.xlu0 %v544, 112
      %v681 = vpop.permute.xlu0 %680
      %682 = vrot.lane.b32.xlu0 %v545, 112
      %v683 = vpop.permute.xlu0 %682
      %v684 = vsel %vm323, %v677, %v679
      %v685 = vsel %vm323, %v679, %v681
      %v686 = vsel %vm323, %v681, %v683
      %v692 = vsel %vm323, %v683, %v677
      %v693 = vmul.f32 %v684, %v336
      %v694 = vmul.f32 %v685, %v340
      %v695 = vmul.f32 %v686, %v344
      %v696 = vmul.f32 %v692, %v348
      %697 = vrot.lane.b32.xlu0 %v542, 111
      %v698 = vpop.permute.xlu0 %697
      %699 = vrot.lane.b32.xlu0 %v543, 111
      %v700 = vpop.permute.xlu0 %699
      %701 = vrot.lane.b32.xlu0 %v544, 111
      %v702 = vpop.permute.xlu0 %701
      %703 = vrot.lane.b32.xlu0 %v545, 111
      %v704 = vpop.permute.xlu0 %703
      %v705 = vsel %vm361, %v698, %v700
      %v706 = vsel %vm361, %v700, %v702
      %v707 = vsel %vm361, %v702, %v704
      %v713 = vsel %vm361, %v704, %v698
      %v714 = vmul.f32 %v705, %v374
      %v715 = vmul.f32 %v706, %v378
      %v716 = vmul.f32 %v707, %v382
      %v717 = vmul.f32 %v713, %v386
      %v718 = vpack.c.bf16 %v588, %v567
      %v719 = vpack.c.bf16 %v589, %v568
      %v720 = vpack.c.bf16 %v590, %v569
      %v721 = vpack.c.bf16 %v591, %v570
      %v722 = vpack.c.bf16 %v630, %v609
      %v723 = vpack.c.bf16 %v631, %v610
      %v724 = vpack.c.bf16 %v632, %v611
      %v725 = vpack.c.bf16 %v633, %v612
      %v726 = vpack.c.bf16 %v651, %v542
      %v727 = vpack.c.bf16 %v652, %v543
      %v728 = vpack.c.bf16 %v653, %v544
      %v729 = vpack.c.bf16 %v654, %v545
      %v730 = vpack.c.bf16 %v693, %v672
      %v731 = vpack.c.bf16 %v694, %v673
      %v732 = vpack.c.bf16 %v695, %v674
      %v733 = vpack.c.bf16 %v696, %v675
      %v734 = vpack.c.bf16 %v714, %v714
      %v735 = vpack.c.bf16 %v715, %v715
      %v736 = vpack.c.bf16 %v716, %v716
      %v737 = vpack.c.bf16 %v717, %v717
      %739 = vset.pattern.permute.xlu0 0
      %740 = vperm.xlu0 %739, %v68
      %v741 = vpop.permute.xlu0 %740
      %v744 = vsel %vm419, %v67, 0
      %v747 = vsel %vm423, %v734, 0
      %v750 = vsel %vm423, %v735, 0
      %v753 = vsel %vm423, %v736, 0
      %v756 = vsel %vm423, %v737, 0
      %758 = vmatprep.subr.bf16.mxu0 0
      %759 = vmatpush1.bf16.msra.mxu0 0
      %760 = vmatprep.subr.bf16.mxu0 0
      %761 = vmatpush1.bf16.msra.mxu0 0
      %762 = vmatprep.subr.bf16.mxu0 0
      %763 = vmatpush1.bf16.msra.mxu0 0
      %764 = vmatprep.subr.bf16.mxu0 %v750
      %765 = vmatpush1.bf16.msra.mxu0 %v747
      %766 = vmatprep.subr.bf16.mxu0 %v731
      %767 = vmatpush1.bf16.msra.mxu0 %v730
      %768 = vmatprep.subr.bf16.mxu0 %v727
      %769 = vmatpush1.bf16.msra.mxu0 %v726
      %770 = vmatprep.subr.bf16.mxu0 %v723
      %771 = vmatpush1.bf16.msra.mxu0 %v722
      %772 = vmatprep.subr.bf16.mxu0 %v719
      %773 = vmatpush1.bf16.msra.mxu0 %v718
      %774 = vmatprep.subr.bf16.mxu0 0
      %775 = vmatpush2.bf16.msra.mxu0 0
      %776 = vmatprep.subr.bf16.mxu0 0
      %777 = vmatpush2.bf16.msra.mxu0 0
      %778 = vmatprep.subr.bf16.mxu0 0
      %779 = vmatpush2.bf16.msra.mxu0 0
      %780 = vmatprep.subr.bf16.mxu0 0
      %781 = vmatpush2.bf16.msra.mxu0 0
      %782 = vmatprep.subr.bf16.mxu0 0
      %783 = vmatpush2.bf16.msra.mxu0 0
      %784 = vmatprep.subr.bf16.mxu0 0
      %785 = vmatpush2.bf16.msra.mxu0 0
      %786 = vmatprep.subr.bf16.mxu0 0
      %787 = vmatpush2.bf16.msra.mxu0 0
      %788 = vmatprep.subr.bf16.mxu0 0
      %789 = vmatpush2.bf16.msra.mxu0 0
      %790 = vmatprep.mubr.bf16.mxu0 0
      %791 = vmatmul.mubr.bf16.gmra.mxu0 %v744
      %v792 = vpop.f32.mrf.mxu0
      %v793 = vadd.f32 %v741, %v792
      %v794 = vpop.f32.mrf.mxu0
      %v795 = vadd.f32 %v741, %v794
      %v796 = vpop.f32.mrf.mxu0
      %v797 = vpop.f32.mrf.mxu0
      %798 = vdwg.mxu0
      %799 = vmatprep.subr.bf16.mxu0 0
      %800 = vmatpush1.bf16.msra.mxu0 0
      %801 = vmatprep.subr.bf16.mxu0 0
      %802 = vmatpush1.bf16.msra.mxu0 0
      %803 = vmatprep.subr.bf16.mxu0 0
      %804 = vmatpush1.bf16.msra.mxu0 0
      %805 = vmatprep.subr.bf16.mxu0 %v756
      %806 = vmatpush1.bf16.msra.mxu0 %v753
      %807 = vmatprep.subr.bf16.mxu0 %v733
      %808 = vmatpush1.bf16.msra.mxu0 %v732
      %809 = vmatprep.subr.bf16.mxu0 %v729
      %810 = vmatpush1.bf16.msra.mxu0 %v728
      %811 = vmatprep.subr.bf16.mxu0 %v725
      %812 = vmatpush1.bf16.msra.mxu0 %v724
      %813 = vmatprep.subr.bf16.mxu0 %v721
      %814 = vmatpush1.bf16.msra.mxu0 %v720
      %815 = vmatprep.subr.bf16.mxu0 0
      %816 = vmatpush2.bf16.msra.mxu0 0
      %817 = vmatprep.subr.bf16.mxu0 0
      %818 = vmatpush2.bf16.msra.mxu0 0
      %819 = vmatprep.subr.bf16.mxu0 0
      %820 = vmatpush2.bf16.msra.mxu0 0
      %821 = vmatprep.subr.bf16.mxu0 0
      %822 = vmatpush2.bf16.msra.mxu0 0
      %823 = vmatprep.subr.bf16.mxu0 0
      %824 = vmatpush2.bf16.msra.mxu0 0
      %825 = vmatprep.subr.bf16.mxu0 0
      %826 = vmatpush2.bf16.msra.mxu0 0
      %827 = vmatprep.subr.bf16.mxu0 0
      %828 = vmatpush2.bf16.msra.mxu0 0
      %829 = vmatprep.subr.bf16.mxu0 0
      %830 = vmatpush2.bf16.msra.mxu0 0
      %831 = vmatprep.mubr.bf16.mxu0 0
      %832 = vmatmul.mubr.bf16.gmra.mxu0 %v744
      %v833 = vpop.f32.mrf.mxu0
      %v834 = vadd.f32 %v741, %v833
      %v835 = vpop.f32.mrf.mxu0
      %v836 = vadd.f32 %v741, %v835
      %v837 = vpop.f32.mrf.mxu0
      %v838 = vpop.f32.mrf.mxu0
      %839 = vdwg.mxu0
      %s840 = sld [smem:[#allocation2 + %s74]]
      %v841 = vstv %s840
      %v842 = vmul.f32 %v841, %v793
      %v843 = vmul.f32 %v841, %v795
      %v844 = vmul.f32 %v841, %v834
      %v845 = vmul.f32 %v841, %v836
      %v846 = vsub.f32 %v79, %v842
      %v847 = vsub.f32 %v80, %v843
      %v848 = vsub.f32 %v81, %v844
      %v849 = vsub.f32 %v82, %v845
      %s850 = sld [smem:[#allocation4 + %s74]]
      %v851 = vstv %s850
      %v852 = vmul.f32 %v846, %v851
      %v853 = vmul.f32 %v847, %v851
      %v854 = vmul.f32 %v848, %v851
      %v855 = vmul.f32 %v849, %v851
      %s856 = smul.u32 %s74, 4
      %s857 = smul.addr %s856, 8
      %s858 = scalar_lea.vmem %s8, %s857
      %v859 = vld [vmem:[%s858] sm:$0xff]
      %v860 = vld [vmem:[%s858 + $0x8] sm:$0xff]
      %v861 = vld [vmem:[%s858 + $0x10] sm:$0xff]
      %v862 = vld [vmem:[%s858 + $0x18] sm:$0xff]
      %v863 = vadd.f32 %v852, %v859
      %v864 = vadd.f32 %v853, %v860
      %v865 = vadd.f32 %v854, %v861
      %v866 = vadd.f32 %v855, %v862
    $region50: #{_sample.1} parent=1 // loop_footer
      %s78 = sadd.s32 1, %s74
    $region51: #{_sample.1} parent=1 // loop_footer_branch
      %73 = sbr.rel target = $region47
    $region52: #{_sample.1} parent=1 // loop_exit
      _
    %v867 = vmax.f32 %v79, -1.0
    %v868 = vmax.f32 %v80, -1.0
    %v869 = vmax.f32 %v81, -1.0
    %v870 = vmax.f32 %v82, -1.0
    %v871 = vmin.f32 %v867, 1.0
    %v872 = vmin.f32 %v868, 1.0
    %v873 = vmin.f32 %v869, 1.0
    %v874 = vmin.f32 %v870, 1.0
    %875 = vst [vmem:[%s9] sm:$0xff] %v871
    %876 = vst [vmem:[%s9 + $0x8] sm:$0xff] %v872
    %877 = vst [vmem:[%s9 + $0x10] sm:$0xff] %v873
    %878 = vst [vmem:[%s9 + $0x18] sm:$0xff] %v874
    // Predicated region
    $region53: #{_sample.1} parent=1 // pred_check
      _
    $region54: #{_sample.1} parent=1 // pred_check_branch
      %880 = sbr.rel (0) target = $region56
    $region55: #{_sample.1} parent=1 // pred_region
      _
    $region56: #{_sample.1} parent=1 // pred_fallthru
      _
    // Predicated region
    $region57: #{_sample.1} parent=1 // pred_check
      _
    $region58: #{_sample.1} parent=1 // pred_check_branch
      %882 = sbr.rel (0) target = $region60
    $region59: #{_sample.1} parent=1 // pred_region
      _
    $region60: #{_sample.1} parent=1 // pred_fallthru
      _
    %883 = vsyncpa [#allocation3], 1
    %884 = vsyncpa [#allocation5], 1

</llo_original>
